<compile_context>
chip_gen: v6e
topology: v6e:2x2x1
jax: 0.10.0
libtpu: 0.0.40
codegen_flags: <defaults>
</compile_context>

<pallas_src>
import jax
import jax.numpy as jnp
from jax.experimental import pallas as pl
from jax.experimental.pallas import tpu as pltpu


_LANE = 128                  # vreg lane width
_X_BLOCK_BYTES = 2 << 20     # ~2 MiB activation per grid step (x); out + bias + 2x buffers << 16 MiB


def _largest_divisor_multiple(total, unit, max_val):
    """Largest multiple of `unit` that divides `total` and is <= max_val (or None)."""
    t = (min(total, max_val) // unit) * unit
    while t >= unit:
        if total % t == 0:
            return t
        t -= unit
    return None


def _sublane_unit(itemsize):
    # minimum sublane granularity: 8 rows of 32-bit; packed dtypes pack 2x / 4x per sublane
    return max(8, 32 // max(1, itemsize))


# ----------------------------------------------------------------------------
# Kernels
# ----------------------------------------------------------------------------
def _flat_add_kernel(x_ref, bias_ref, out_ref):
    # x_ref/out_ref: (bb, tn) in the activation dtype; bias_ref: (1, tn) f32.
    # Compute in f32 vregs (safe on v5e, exact for f32 activations), store native dtype.
    out_ref[...] = (x_ref[...].astype(jnp.float32) + bias_ref[...]).astype(out_ref.dtype)


def _bcl_add_kernel(x_ref, bias_ref, out_ref):
    # Fallback layout: x_ref/out_ref: (bb, C, L); bias_ref: (C, L) f32.
    out_ref[...] = (x_ref[...].astype(jnp.float32)
                    + bias_ref[...][None, :, :]).astype(out_ref.dtype)


# ----------------------------------------------------------------------------
# Wrapper
# ----------------------------------------------------------------------------
def learnable_positional_encoding(x, pos_table, scale,
                                  adj_inp=None, cheb_polynomials=None,
                                  L_tilde=None, eval=False, *, donate_x=False):
    """x: (B, C, L, 1); pos_table: (max_length+93, C); scale: (1, 1, C)."""
    del adj_inp, cheb_polynomials, L_tilde, eval        # unused by the PyTorch forward as well

    x = jnp.asarray(x)                                  # keep native dtype (bf16 stays bf16)
    b, c, l, one = x.shape
    assert one == 1, "last dim of x must be 1 (it is squeezed in the forward)"
    assert pos_table.shape[0] >= l and pos_table.shape[1] == c, \
        "embedding table must cover seq_len and have embedding_dim == C"

    # Tiny (few-KiB) parameter-sized bias, built once in the kernel's layout:
    #   bias[c, l] = scale[c] * table[l, c]   (f32 so the in-kernel add runs in f32 vregs)
    bias_cl = (jnp.asarray(scale, jnp.float32).reshape(c, 1)
               * jnp.asarray(pos_table[:l], jnp.float32).T)          # (C, L)

    itemsize = jnp.dtype(x.dtype).itemsize
    n = c * l

    if n % _LANE == 0:
        # ---------------- lane-dense path: flat (B, C*L) ----------------------
        x_flat = x.reshape(b, n)                                      # free row-major view
        bias_flat = bias_cl.reshape(1, n)                             # matches flat layout

        # feature tile: multiple of 128 that divides N, <= ~512 KiB of activation
        tn = _largest_divisor_multiple(
            n, _LANE, max(_LANE, (_X_BLOCK_BYTES // 4) // itemsize))
        if tn is None:
            tn = n
        # batch tile: <= ~2 MiB of x per step, multiple of the sublane unit (or full B)
        max_rows = max(1, _X_BLOCK_BYTES // (tn * itemsize))
        bb = b if max_rows >= b else _largest_divisor_multiple(
            b, _sublane_unit(itemsize), max_rows)
        if bb is None:
            bb = b

        grid = (b // bb, n // tn)
        out = pl.pallas_call(
            _flat_add_kernel,
            out_shape=jax.ShapeDtypeStruct((b, n), x.dtype),
            grid=grid,
            in_specs=[
                pl.BlockSpec((bb, tn), lambda i, j: (i, j)),
                pl.BlockSpec((1, tn), lambda i, j: (0, j)),   # constant over batch -> stays in VMEM
            ],
            out_specs=pl.BlockSpec((bb, tn), lambda i, j: (i, j)),
            compiler_params=pltpu.CompilerParams(
                dimension_semantics=("parallel", "parallel")),
            input_output_aliases={0: 0} if donate_x else {},
        )(x_flat, bias_flat)
        return out.reshape(b, c, l, 1)

    # ---------------- fallback path: (B, C, L) blocks ----------------------------
    # TODO(synk): C*L not a multiple of 128 leaves partially-masked lane stores;
    # a padded lane-dense variant would recover full-width stores here too.
    x3 = x.reshape(b, c, l)
    row_bytes = c * l * itemsize
    max_rows = max(1, _X_BLOCK_BYTES // row_bytes)
    bb = b if max_rows >= b else _largest_divisor_multiple(
        b, _sublane_unit(itemsize), max_rows)
    if bb is None:
        bb = b

    out = pl.pallas_call(
        _bcl_add_kernel,
        out_shape=jax.ShapeDtypeStruct((b, c, l), x.dtype),
        grid=(b // bb,),
        in_specs=[
            pl.BlockSpec((bb, c, l), lambda i: (i, 0, 0)),
            pl.BlockSpec((c, l), lambda i: (0, 0)),           # parameter resident in VMEM
        ],
        out_specs=pl.BlockSpec((bb, c, l), lambda i: (i, 0, 0)),
        compiler_params=pltpu.CompilerParams(dimension_semantics=("parallel",)),
        input_output_aliases={0: 0} if donate_x else {},
    )(x3, bias_cl)
    return out.reshape(b, c, l, 1)


# ----------------------------------------------------------------------------
# Pure-JAX reference (mirrors the PyTorch forward exactly) for verification.
# ----------------------------------------------------------------------------
def positional_encoding_reference(x, pos_table, scale):
    b, c, s, _ = x.shape
    xp = jnp.transpose(jnp.asarray(x, jnp.float32)[..., 0], (0, 2, 1))        # (B, L, C)
    enc = xp + jnp.asarray(scale, jnp.float32) * jnp.asarray(pos_table[:s], jnp.float32)[None]
    return jnp.transpose(enc, (0, 2, 1))[..., None].astype(x.dtype)           # (B, C, L, 1)


if __name__ == "__main__":
    B, C, SEQ = 2, 32, 16          # x: (B, C, SEQ, 1); embedding_dim == C; C*SEQ = 512 (lane-dense path)
    MAX_LENGTH = 16                # embedding table has MAX_LENGTH + 93 rows (>= SEQ)

    key = jax.random.PRNGKey(0)
    kx, kt, ks = jax.random.split(key, 3)
    x = jax.random.normal(kx, (B, C, SEQ, 1), jnp.float32)
    pos_table = 0.02 * jax.random.normal(kt, (MAX_LENGTH + 93, C), jnp.float32)
    # nn.Parameter(torch.ones(1, 1, C)) at init; perturb so the scale-mul is actually exercised
    scale = 1.0 + 0.1 * jax.random.normal(ks, (1, 1, C), jnp.float32)

    # Extra forward args are unused by the module; pass placeholders for signature parity.
    adj_inp = jnp.zeros((SEQ, SEQ), jnp.float32)
    L_tilde = jnp.zeros((SEQ, SEQ), jnp.float32)
    cheb_polys = [jnp.eye(SEQ, dtype=jnp.float32), L_tilde]

    out = learnable_positional_encoding(x, pos_table, scale, adj_inp, cheb_polys, L_tilde)
    out = jax.block_until_ready(out)
    ref = positional_encoding_reference(x, pos_table, scale)
    assert out.shape == (B, C, SEQ, 1) and out.dtype == x.dtype, (out.shape, out.dtype)
    if not bool(jnp.allclose(out, ref, rtol=1e-5, atol=1e-5)):
        raise SystemExit("lane-dense path mismatch: max abs diff = %e"
                         % float(jnp.max(jnp.abs(out - ref))))

    # Exercise the (C*L % 128 != 0) fallback path as well.
    C2, L2 = 12, 10
    x2 = jax.random.normal(kx, (B, C2, L2, 1), jnp.float32)
    tbl2 = 0.02 * jax.random.normal(kt, (L2 + 93, C2), jnp.float32)
    sc2 = 1.0 + 0.1 * jax.random.normal(ks, (1, 1, C2), jnp.float32)
    out2 = jax.block_until_ready(learnable_positional_encoding(x2, tbl2, sc2))
    ref2 = positional_encoding_reference(x2, tbl2, sc2)
    if not bool(jnp.allclose(out2, ref2, rtol=1e-5, atol=1e-5)):
        raise SystemExit("fallback path mismatch: max abs diff = %e"
                         % float(jnp.max(jnp.abs(out2 - ref2))))

    print("KERNEL_OK")
</pallas_src>

<mosaic_0001>
module attributes {stable_mosaic.version = 11 : i64} {
  func.func @_flat_add_kernel(%arg0: i32, %arg1: i32, %arg2: memref<2x512xf32, #tpu.memory_space<vmem>>, %arg3: memref<1x512xf32, #tpu.memory_space<vmem>>, %arg4: memref<2x512xf32, #tpu.memory_space<vmem>>) attributes {dimension_semantics = [#tpu.dimension_semantics<parallel>, #tpu.dimension_semantics<parallel>], iteration_bounds = array<i64: 1, 1>, scalar_prefetch = 0 : i64, scratch_operands = 0 : i64, tpu.core_type = #tpu.core_type<tc>, window_params = [{transform_indices = @transform_0, window_bounds = array<i64: 2, 512>}, {transform_indices = @transform_1, window_bounds = array<i64: 1, 512>}, {transform_indices = @transform_2, window_bounds = array<i64: 2, 512>}]} {
    %c0 = arith.constant 0 : index
    %c0_0 = arith.constant 0 : index
    %0 = vector.load %arg2[%c0, %c0_0] : memref<2x512xf32, #tpu.memory_space<vmem>>, vector<2x512xf32>
    %c0_1 = arith.constant 0 : index
    %c0_2 = arith.constant 0 : index
    %1 = vector.load %arg3[%c0_1, %c0_2] : memref<1x512xf32, #tpu.memory_space<vmem>>, vector<1x512xf32>
    %2 = vector.broadcast %1 : vector<1x512xf32> to vector<2x512xf32>
    %3 = arith.addf %0, %2 : vector<2x512xf32>
    %c0_3 = arith.constant 0 : index
    %c0_4 = arith.constant 0 : index
    %4 = vector.load %arg4[%c0_3, %c0_4] : memref<2x512xf32, #tpu.memory_space<vmem>>, vector<2x512xf32>
    tpu.vector_store %arg4[%c0_3, %c0_4], %3 {strides = array<i32>} : memref<2x512xf32, #tpu.memory_space<vmem>>, vector<2x512xf32>,
    return
  }
  func.func @transform_0(%arg0: i32, %arg1: i32) -> (i32, i32) {
    %c0_i32 = arith.constant 0 : i32
    return %arg0, %arg1 : i32, i32
  }
  func.func @transform_1(%arg0: i32, %arg1: i32) -> (i32, i32) {
    %c0_i32 = arith.constant 0 : i32
    %c0_i32_0 = arith.constant 0 : i32
    return %c0_i32, %arg1 : i32, i32
  }
  func.func @transform_2(%arg0: i32, %arg1: i32) -> (i32, i32) {
    %c0_i32 = arith.constant 0 : i32
    return %arg0, %arg1 : i32, i32
  }
}

</mosaic_0001>

<llo_original>
// kernel: tpu_custom_call.1
$region0: #{tpu_custom_call.1}
  #allocation0 [shape = 'u32[]', space=smem, size = 0x4, offset = 0x4, fixed_abs, tag = 'smem constant byte address 0x4 - core index']
  #allocation1 [shape = 'u32[144,128]{1,0:T(1,128)}', space=vmem, size = 0x12000, scoped, tag = 'internal scratch']
  %s0 = inlined_call_operand.hbm [shape: f32[2,512], index: 0, kind: input, shape index: {}]
  %s1 = inlined_call_operand.hbm [shape: f32[1,512], index: 1, kind: input, shape index: {}]
  %s2 = inlined_call_operand.hbm [shape: f32[2,512], index: 2, kind: output, shape index: {}]
  %s3 = sld [smem:[#allocation0]]
  $region26: #{tpu_custom_call.1} parent=0
    _
  %s5 = ssub.s32 1, %s3
  %s6 = scalar_select 0, %s5, %s3
  $region1: #{tpu_custom_call.1} parent=0
    #allocation2 [shape = 'u8[4096]{0}', space=vmem, size = 0x1000, scoped, tag = 'input window, operand 0, single buffered']
    #allocation3 [shape = 's32[1]{0}', space=sflag, size = 0x4, scoped, tag = 'scoped memory for tpu_custom_call.1']
    #allocation4 [shape = 's32[1]{0}', space=sflag, size = 0x4, scoped, tag = 'scoped memory for tpu_custom_call.1']
    #allocation5 [shape = 'u8[2048]{0}', space=vmem, size = 0x800, scoped, tag = 'input window, operand 1, single buffered']
    #allocation6 [shape = 's32[1]{0}', space=sflag, size = 0x4, scoped, tag = 'scoped memory for tpu_custom_call.1']
    #allocation7 [shape = 'u8[4096]{0}', space=vmem, size = 0x1000, scoped, tag = 'output window, operand 0, single buffered']
    %7 = vsyncpa [#allocation3], 0
    %8 = vsyncpa [#allocation6], 0
    %9 = vsyncpa [#allocation4], 0
    // Predicated region
    $region2: #{tpu_custom_call.1} parent=1 // pred_check
      _
    $region3: #{tpu_custom_call.1} parent=1 // pred_check_branch
      %11 = sbr.rel (0) target = $region5
    $region4: #{tpu_custom_call.1} parent=1 // pred_region
      %s13 = ssub.s32 128, 128
      %14 = vsyncadd [#allocation3], %s13
      %s16 = sshll.u32 [#allocation2], 4
      %s17 = int_to_ptr.vmem [resolvable:$true] %s16
      %19 = dma.hbm_to_vmem [thread:$0]  %s0, 128, %s17, [#allocation3]
    $region5: #{tpu_custom_call.1} parent=1 // pred_fallthru
      _
    // Predicated region
    $region6: #{tpu_custom_call.1} parent=1 // pred_check
      _
    $region7: #{tpu_custom_call.1} parent=1 // pred_check_branch
      %21 = sbr.rel (0) target = $region9
    $region8: #{tpu_custom_call.1} parent=1 // pred_region
      %s23 = ssub.s32 64, 64
      %24 = vsyncadd [#allocation6], %s23
      %s26 = sshll.u32 [#allocation5], 4
      %s27 = int_to_ptr.vmem [resolvable:$true] %s26
      %29 = dma.hbm_to_vmem [thread:$0]  %s1, 64, %s27, [#allocation6]
    $region9: #{tpu_custom_call.1} parent=1 // pred_fallthru
      _
    // Predicated region
    $region10: #{tpu_custom_call.1} parent=1 // pred_check
      _
    $region11: #{tpu_custom_call.1} parent=1 // pred_check_branch
      %31 = sbr.rel (0) target = $region13
    $region12: #{tpu_custom_call.1} parent=1 // pred_region
      %32 = dma.done [#allocation3], 128
    $region13: #{tpu_custom_call.1} parent=1 // pred_fallthru
      _
    // Predicated region
    $region14: #{tpu_custom_call.1} parent=1 // pred_check
      _
    $region15: #{tpu_custom_call.1} parent=1 // pred_check_branch
      %34 = sbr.rel (0) target = $region17
    $region16: #{tpu_custom_call.1} parent=1 // pred_region
      %35 = dma.done [#allocation6], 64
    $region17: #{tpu_custom_call.1} parent=1 // pred_fallthru
      _
    %v36 = vld [vmem:[#allocation2] sm:$0xff]
    %v37 = vld [vmem:[#allocation5] sm:$0xf]
    %v39 = vlaneseq
    %v40 = vshrl.u32 %v39, 7
    %v41 = vsub.s32 0, %v40
    %v42 = vrot.slane %v37, %v41
    %v43 = vlaneseq
    %v44 = vshrl.u32 %v43, 7
    %v45 = vsub.s32 1, %v44
    %v46 = vrot.slane %v37, %v45
    %v47 = vlaneseq
    %v48 = vshrl.u32 %v47, 7
    %v49 = vsub.s32 2, %v48
    %v50 = vrot.slane %v37, %v49
    %v51 = vlaneseq
    %v52 = vshrl.u32 %v51, 7
    %v53 = vsub.s32 3, %v52
    %v54 = vrot.slane %v37, %v53
    %v55 = vcombine.low %v42, %v46
    %v56 = vcombine.low %v50, %v54
    %v58 = vunpack.c.l.s4 1983009808
    %v59 = vunpack.c.0.s8 %v58
    %v60 = vlaneseq
    %v61 = vshrl.u32 %v60, 7
    %v62 = vsub.s32 %v59, %v61
    %v63 = vrot.slane %v55, %v62
    %v65 = vunpack.c.l.s4 1983009808
    %v66 = vunpack.c.0.s8 %v65
    %v67 = vlaneseq
    %v68 = vshrl.u32 %v67, 7
    %v69 = vsub.s32 %v66, %v68
    %v70 = vrot.slane %v56, %v69
    %v71 = vcombine.low %v63, %v70
    %v73 = vadd.f32 %v36, %v71
    %74 = vst [vmem:[#allocation7] sm:$0xff] %v73
    // Predicated region
    $region18: #{tpu_custom_call.1} parent=1 // pred_check
      _
    $region19: #{tpu_custom_call.1} parent=1 // pred_check_branch
      %76 = sbr.rel (0) target = $region21
    $region20: #{tpu_custom_call.1} parent=1 // pred_region
      %s78 = ssub.s32 128, 128
      %79 = vsyncadd [#allocation4], %s78
      %s81 = sshll.u32 [#allocation7], 4
      %s82 = int_to_ptr.vmem [resolvable:$true] %s81
      %84 = dma.vmem_to_hbm [thread:$0]  %s82, 128, %s2, [#allocation4]
    $region21: #{tpu_custom_call.1} parent=1 // pred_fallthru
      _
    // Predicated region
    $region22: #{tpu_custom_call.1} parent=1 // pred_check
      _
    $region23: #{tpu_custom_call.1} parent=1 // pred_check_branch
      %86 = sbr.rel (0) target = $region25
    $region24: #{tpu_custom_call.1} parent=1 // pred_region
      %87 = dma.done [#allocation4], 128
    $region25: #{tpu_custom_call.1} parent=1 // pred_fallthru
      _
    %88 = vsyncpa [#allocation3], 1
    %89 = vsyncpa [#allocation6], 1
    %90 = vsyncpa [#allocation4], 1

</llo_original>
